<compile_context>
chip_gen: v7x
topology: tpu7x:2x2x1
jax: 0.10.0
libtpu: 0.0.40
codegen_flags: <defaults>
</compile_context>

<pallas_src>
import functools

import jax
import jax.numpy as jnp
from jax.experimental import pallas as pl
from jax.experimental.pallas import tpu as pltpu


LN_EPS = 1e-5


def _round_up(x, m):
    return (x + m - 1) // m * m


def _transformer_linear_kernel(x_ref, g_ref, beta_ref,
                               w1_ref, b1_ref, w2_ref, b2_ref,
                               o_ref, xn_scr, acc_scr, *, d_valid):
    """Grid = (row_tiles, ff_tiles); the ff axis streams the reduction over ff_dim."""
    k = pl.program_id(1)

    @pl.when(k == 0)
    def _init():
        # LayerNorm in f32 over the un-padded feature dim, once per row tile.
        x = x_ref[...].astype(jnp.float32)                      # (TM, Dp)
        inv_d = 1.0 / d_valid
        mean = jnp.sum(x, axis=-1, keepdims=True) * inv_d       # zero-padded lanes add 0
        xc = x - mean
        if d_valid != x.shape[-1]:
            lane = jax.lax.broadcasted_iota(jnp.int32, x.shape, 1)
            xc = jnp.where(lane < d_valid, xc, 0.0)             # keep padded lanes out of var
        var = jnp.sum(xc * xc, axis=-1, keepdims=True) * inv_d  # biased var (torch LN)
        xn = xc * jax.lax.rsqrt(var + LN_EPS)
        xn = xn * g_ref[...] + beta_ref[...]                    # padded lanes -> 0
        xn_scr[...] = xn.astype(xn_scr.dtype)                   # bf16 for the MXU
        acc_scr[...] = jnp.zeros_like(acc_scr)

    # ---- ff1 chunk + bias + ReLU (f32), then accumulate ff2 chunk (f32 acc) ----
    h = jnp.dot(xn_scr[...], w1_ref[...], preferred_element_type=jnp.float32)
    h = jnp.maximum(h + b1_ref[...], 0.0)                       # (TM, TF) f32
    # TODO(synk): dropout is identity in inference; no RNG masking implemented.
    acc_scr[...] += jnp.dot(h.astype(w2_ref.dtype), w2_ref[...],
                            preferred_element_type=jnp.float32)

    @pl.when(k == pl.num_programs(1) - 1)
    def _finalize():
        o_ref[...] = (acc_scr[...] + b2_ref[...]).astype(o_ref.dtype)


def _vmem_budget_bytes():
    """Generation-aware VMEM budget: ~75% of physical capacity, safe fallback."""
    try:
        cap = int(pltpu.get_tpu_info().vmem_capacity_bytes)
    except Exception:  # unknown chip / interpret mode: assume the smallest (v7x, 64 MiB)
        cap = 64 << 20
    return int(min(max(int(cap * 0.75), 16 << 20), 112 << 20))


def _pick_tiles(n_rows, Dp, F, Op, tile_rows, tile_ff, wbytes, budget):
    """Returns (tm, tf, Fp). tf divides Fp; tf == Fp means weights are VMEM-resident."""
    Fp0 = _round_up(F, 128)

    # Row tile: multiple of 16 (bf16 sublane packing).
    tm = min(_round_up(tile_rows, 16), _round_up(n_rows, 16))
    # v7x has 2 TensorCores sharing the "parallel" row axis: if one tile would
    # cover every row, split it in two so neither core sits idle.
    if n_rows <= tm and n_rows >= 32:
        tm = _round_up(-(-n_rows // 2), 16)

    def est(tm_, tf_):
        return (2 * tm_ * Dp * 4                # x double buffer (f32)
                + 2 * tm_ * Op * 4              # out double buffer (f32)
                + 2 * Dp * tf_ * wbytes         # W1 slice double buffer
                + 2 * tf_ * Op * wbytes         # W2 slice double buffer
                + 2 * (tf_ + Op + 2 * Dp) * 4   # b1 / b2 / gamma / beta
                + tm_ * Dp * wbytes             # xn scratch
                + tm_ * Op * 4                  # f32 accumulator scratch
                + 6 * tm_ * tf_                 # h intermediate (f32) + bf16 cast copy
                + (4 << 20))                    # spill / compiler-scratch slack

    # 1) Weights-resident variant: ff grid axis collapses to 1, so W1/W2 block
    #    indices never change and Pallas DMAs them exactly once for the grid.
    tm_res = tm
    while True:
        if est(tm_res, Fp0) <= budget:
            return tm_res, Fp0, Fp0
        if tm_res <= 256:
            break
        tm_res = max(256, (tm_res // 2 // 16) * 16)

    # 2) Streamed variant: fixed-size ff tiles; pad Fp UP so tf divides it
    #    (never degrade tf to 128 via gcd for non-power-of-two ff_dim).
    tf = min(max(128, _round_up(tile_ff, 128)), Fp0)
    while est(tm, tf) > budget and tm > 16:
        tm = max(16, (tm // 2 // 16) * 16)
    while est(tm, tf) > budget and tf > 128:
        tf = max(128, (tf // 2 // 128) * 128)
    return tm, tf, _round_up(Fp0, tf)


@functools.partial(jax.jit,
                   static_argnames=("tile_rows", "tile_ff", "matmul_dtype"))
def transformer_linear(x, gamma, beta, w1, b1, w2, b2, *,
                       tile_rows=1024, tile_ff=512,
                       matmul_dtype=jnp.bfloat16):
    """x: (B, T, D) float32. Weights stored as (in, out). Returns (B, T, output_dim)."""
    B, T, D = x.shape
    F = w1.shape[1]
    O = w2.shape[1]
    n_rows = B * T

    # ---- lane-align feature dims to 128, rows to the row tile (zero padding) ----
    Dp = _round_up(D, 128)
    Op = _round_up(O, 128)
    wbytes = jnp.dtype(matmul_dtype).itemsize
    budget = _vmem_budget_bytes()
    tm, tf, Fp = _pick_tiles(n_rows, Dp, F, Op, tile_rows, tile_ff, wbytes, budget)
    n_rows_p = _round_up(n_rows, tm)

    x2 = jnp.pad(x.reshape(n_rows, D).astype(jnp.float32),
                 ((0, n_rows_p - n_rows), (0, Dp - D)))
    gamma2 = jnp.pad(gamma.astype(jnp.float32), (0, Dp - D)).reshape(1, Dp)
    beta2 = jnp.pad(beta.astype(jnp.float32), (0, Dp - D)).reshape(1, Dp)
    w1p = jnp.pad(w1, ((0, Dp - D), (0, Fp - F))).astype(matmul_dtype)
    b1p = jnp.pad(b1.astype(jnp.float32), (0, Fp - F)).reshape(1, Fp)
    w2p = jnp.pad(w2, ((0, Fp - F), (0, Op - O))).astype(matmul_dtype)
    b2p = jnp.pad(b2.astype(jnp.float32), (0, Op - O)).reshape(1, Op)

    grid = (n_rows_p // tm, Fp // tf)

    kernel = functools.partial(_transformer_linear_kernel, d_valid=D)

    out = pl.pallas_call(
        kernel,
        out_shape=jax.ShapeDtypeStruct((n_rows_p, Op), x.dtype),
        grid_spec=pltpu.PrefetchScalarGridSpec(
            num_scalar_prefetch=0,
            grid=grid,
            in_specs=[
                pl.BlockSpec((tm, Dp), lambda i, k: (i, 0)),    # x rows (constant over k)
                pl.BlockSpec((1, Dp), lambda i, k: (0, 0)),     # gamma
                pl.BlockSpec((1, Dp), lambda i, k: (0, 0)),     # beta
                pl.BlockSpec((Dp, tf), lambda i, k: (0, k)),    # W1 ff-slice (once if tf==Fp)
                pl.BlockSpec((1, tf), lambda i, k: (0, k)),     # b1 ff-slice
                pl.BlockSpec((tf, Op), lambda i, k: (k, 0)),    # W2 ff-slice (once if tf==Fp)
                pl.BlockSpec((1, Op), lambda i, k: (0, 0)),     # b2
            ],
            out_specs=pl.BlockSpec((tm, Op), lambda i, k: (i, 0)),  # lane-dense (Op % 128 == 0)
            scratch_shapes=[
                pltpu.VMEM((tm, Dp), matmul_dtype),   # LayerNorm output, reused across ff steps
                pltpu.VMEM((tm, Op), jnp.float32),    # ff2 accumulator
            ],
        ),
        compiler_params=pltpu.CompilerParams(
            dimension_semantics=("parallel", "arbitrary"),
            vmem_limit_bytes=budget,
        ),
    )(x2, gamma2, beta2, w1p, b1p, w2p, b2p)

    return out[:n_rows, :O].reshape(B, T, O)


def _reference(x, gamma, beta, w1, b1, w2, b2, matmul_dtype=jnp.float32):
    mean = jnp.mean(x, axis=-1, keepdims=True)
    var = jnp.mean((x - mean) ** 2, axis=-1, keepdims=True)
    xn = (x - mean) * jax.lax.rsqrt(var + LN_EPS) * gamma + beta
    h = jnp.dot(xn.astype(matmul_dtype), w1.astype(matmul_dtype),
                preferred_element_type=jnp.float32) + b1
    h = jnp.maximum(h, 0.0)
    return jnp.dot(h.astype(matmul_dtype), w2.astype(matmul_dtype),
                   preferred_element_type=jnp.float32) + b2


if __name__ == "__main__":
    # Small shapes consistent with the module config.
    B, T = 2, 8
    input_dim, ff_dim, output_dim = 32, 64, 32

    key = jax.random.PRNGKey(0)
    kx, kg, kb, kw1, kb1, kw2, kb2 = jax.random.split(key, 7)

    x = jax.random.normal(kx, (B, T, input_dim), dtype=jnp.float32)

    # Deterministic parameter init (shapes follow nn.LayerNorm / nn.Linear).
    gamma = jnp.ones((input_dim,), jnp.float32) + 0.01 * jax.random.normal(kg, (input_dim,))
    beta = 0.01 * jax.random.normal(kb, (input_dim,), dtype=jnp.float32)
    # Stored as (in, out) = transposed relative to torch's (out, in) weight.
    w1 = (1.0 / jnp.sqrt(input_dim)) * jax.random.normal(kw1, (input_dim, ff_dim), dtype=jnp.float32)
    b1 = (1.0 / jnp.sqrt(input_dim)) * jax.random.normal(kb1, (ff_dim,), dtype=jnp.float32)
    w2 = (1.0 / jnp.sqrt(ff_dim)) * jax.random.normal(kw2, (ff_dim, output_dim), dtype=jnp.float32)
    b2 = (1.0 / jnp.sqrt(ff_dim)) * jax.random.normal(kb2, (output_dim,), dtype=jnp.float32)

    out = transformer_linear(x, gamma, beta, w1, b1, w2, b2)
    out = jax.block_until_ready(out)
    assert out.shape == (B, T, output_dim)

    # Precision-matched reference (bf16 matmul operands, f32 accumulation).
    ref_bf16 = _reference(x, gamma, beta, w1, b1, w2, b2, matmul_dtype=jnp.bfloat16)
    assert jnp.allclose(out, ref_bf16, atol=1e-3, rtol=1e-3), "mismatch vs bf16-matched reference"

    # Sanity check against the pure-f32 reference (looser: bf16 MXU inputs).
    ref_f32 = _reference(x, gamma, beta, w1, b1, w2, b2, matmul_dtype=jnp.float32)
    assert jnp.allclose(out, ref_f32, atol=5e-2, rtol=5e-2), "mismatch vs f32 reference"

    # Also exercise the non-divisible-row path (padding instead of assert).
    x_odd = jax.random.normal(kx, (2, 7, input_dim), dtype=jnp.float32)
    out_odd = jax.block_until_ready(
        transformer_linear(x_odd, gamma, beta, w1, b1, w2, b2))
    ref_odd = _reference(x_odd, gamma, beta, w1, b1, w2, b2, matmul_dtype=jnp.bfloat16)
    assert out_odd.shape == (2, 7, output_dim)
    assert jnp.allclose(out_odd, ref_odd, atol=1e-3, rtol=1e-3), "mismatch on padded-row path"

    # Exercise the streamed (small tile) configuration path as well.
    out_small = jax.block_until_ready(
        transformer_linear(x, gamma, beta, w1, b1, w2, b2, tile_rows=16, tile_ff=128))
    assert jnp.allclose(out_small, ref_bf16, atol=1e-3, rtol=1e-3), "mismatch on small-tile path"

    print("KERNEL_OK")
</pallas_src>

<mosaic_0001>
module attributes {stable_mosaic.version = 11 : i64} {
  func.func @_transformer_linear_kernel(%arg0: i32, %arg1: i32, %arg2: memref<16x128xf32, #tpu.memory_space<vmem>>, %arg3: memref<1x128xf32, #tpu.memory_space<vmem>>, %arg4: memref<1x128xf32, #tpu.memory_space<vmem>>, %arg5: memref<128x128xbf16, #tpu.memory_space<vmem>>, %arg6: memref<1x128xf32, #tpu.memory_space<vmem>>, %arg7: memref<128x128xbf16, #tpu.memory_space<vmem>>, %arg8: memref<1x128xf32, #tpu.memory_space<vmem>>, %arg9: memref<16x128xf32, #tpu.memory_space<vmem>>, %arg10: memref<16x128xbf16, #tpu.memory_space<vmem>>, %arg11: memref<16x128xf32, #tpu.memory_space<vmem>>) attributes {dimension_semantics = [#tpu.dimension_semantics<parallel>, #tpu.dimension_semantics<arbitrary>], iteration_bounds = array<i64: 1, 1>, scalar_prefetch = 0 : i64, scratch_operands = 2 : i64, tpu.core_type = #tpu.core_type<tc>, window_params = [{transform_indices = @transform_0, window_bounds = array<i64: 16, 128>}, {pipeline_mode = #tpu.pipeline_mode<synchronous>, transform_indices = @transform_1, window_bounds = array<i64: 1, 128>}, {pipeline_mode = #tpu.pipeline_mode<synchronous>, transform_indices = @transform_2, window_bounds = array<i64: 1, 128>}, {transform_indices = @transform_3, window_bounds = array<i64: 128, 128>}, {transform_indices = @transform_4, window_bounds = array<i64: 1, 128>}, {transform_indices = @transform_5, window_bounds = array<i64: 128, 128>}, {pipeline_mode = #tpu.pipeline_mode<synchronous>, transform_indices = @transform_6, window_bounds = array<i64: 1, 128>}, {transform_indices = @transform_7, window_bounds = array<i64: 16, 128>}]} {
    %c0_i32 = arith.constant 0 : i32
    %0 = arith.cmpi eq, %arg1, %c0_i32 : i32
    %1 = arith.extui %0 : i1 to i32
    %c0_i32_0 = arith.constant 0 : i32
    %2 = arith.cmpi ne, %1, %c0_i32_0 : i32
    scf.if %2 {
      %c0_16 = arith.constant 0 : index
      %c0_17 = arith.constant 0 : index
      %20 = vector.load %arg2[%c0_16, %c0_17] : memref<16x128xf32, #tpu.memory_space<vmem>>, vector<16x128xf32>
      %cst_18 = arith.constant dense<0.000000e+00> : vector<16xf32>
      %21 = vector.multi_reduction <add>, %20, %cst_18 [1] : vector<16x128xf32> to vector<16xf32>
      %22 = vector.shape_cast %21 : vector<16xf32> to vector<16x1xf32>
      %cst_19 = arith.constant 3.125000e-02 : f32
      %23 = vector.broadcast %cst_19 : f32 to vector<16x1xf32>
      %24 = arith.mulf %22, %23 : vector<16x1xf32>
      %25 = vector.broadcast %24 : vector<16x1xf32> to vector<16x128xf32>
      %26 = arith.subf %20, %25 : vector<16x128xf32>
      %27 = tpu.iota {dimensions = array<i32: 1>} : vector<16x128xi32>
      %c32_i32 = arith.constant 32 : i32
      %28 = vector.broadcast %c32_i32 : i32 to vector<16x128xi32>
      %29 = arith.cmpi slt, %27, %28 : vector<16x128xi32>
      %cst_20 = arith.constant 0.000000e+00 : f32
      %30 = vector.broadcast %cst_20 : f32 to vector<16x128xf32>
      %31 = arith.select %29, %26, %30 : vector<16x128xi1>, vector<16x128xf32>
      %32 = arith.mulf %31, %31 : vector<16x128xf32>
      %cst_21 = arith.constant dense<0.000000e+00> : vector<16xf32>
      %33 = vector.multi_reduction <add>, %32, %cst_21 [1] : vector<16x128xf32> to vector<16xf32>
      %34 = vector.shape_cast %33 : vector<16xf32> to vector<16x1xf32>
      %cst_22 = arith.constant 3.125000e-02 : f32
      %35 = vector.broadcast %cst_22 : f32 to vector<16x1xf32>
      %36 = arith.mulf %34, %35 : vector<16x1xf32>
      %cst_23 = arith.constant 9.99999974E-6 : f32
      %37 = vector.broadcast %cst_23 : f32 to vector<16x1xf32>
      %38 = arith.addf %36, %37 : vector<16x1xf32>
      %39 = math.rsqrt %38 : vector<16x1xf32>
      %40 = vector.broadcast %39 : vector<16x1xf32> to vector<16x128xf32>
      %41 = arith.mulf %31, %40 : vector<16x128xf32>
      %c0_24 = arith.constant 0 : index
      %c0_25 = arith.constant 0 : index
      %42 = vector.load %arg3[%c0_24, %c0_25] : memref<1x128xf32, #tpu.memory_space<vmem>>, vector<1x128xf32>
      %43 = vector.broadcast %42 : vector<1x128xf32> to vector<16x128xf32>
      %44 = arith.mulf %41, %43 : vector<16x128xf32>
      %c0_26 = arith.constant 0 : index
      %c0_27 = arith.constant 0 : index
      %45 = vector.load %arg4[%c0_26, %c0_27] : memref<1x128xf32, #tpu.memory_space<vmem>>, vector<1x128xf32>
      %46 = vector.broadcast %45 : vector<1x128xf32> to vector<16x128xf32>
      %47 = arith.addf %44, %46 : vector<16x128xf32>
      %48 = arith.truncf %47 : vector<16x128xf32> to vector<16x128xbf16>
      %c0_28 = arith.constant 0 : index
      %c0_29 = arith.constant 0 : index
      %49 = vector.load %arg10[%c0_28, %c0_29] : memref<16x128xbf16, #tpu.memory_space<vmem>>, vector<16x128xbf16>
      tpu.vector_store %arg10[%c0_28, %c0_29], %48 {strides = array<i32>} : memref<16x128xbf16, #tpu.memory_space<vmem>>, vector<16x128xbf16>,
      %cst_30 = arith.constant 0.000000e+00 : f32
      %50 = vector.broadcast %cst_30 : f32 to vector<16x128xf32>
      %c0_31 = arith.constant 0 : index
      %c0_32 = arith.constant 0 : index
      %51 = vector.load %arg11[%c0_31, %c0_32] : memref<16x128xf32, #tpu.memory_space<vmem>>, vector<16x128xf32>
      tpu.vector_store %arg11[%c0_31, %c0_32], %50 {strides = array<i32>} : memref<16x128xf32, #tpu.memory_space<vmem>>, vector<16x128xf32>,
    } else {
    }
    %c0 = arith.constant 0 : index
    %c0_1 = arith.constant 0 : index
    %3 = vector.load %arg10[%c0, %c0_1] : memref<16x128xbf16, #tpu.memory_space<vmem>>, vector<16x128xbf16>
    %c0_2 = arith.constant 0 : index
    %c0_3 = arith.constant 0 : index
    %4 = vector.load %arg5[%c0_2, %c0_3] : memref<128x128xbf16, #tpu.memory_space<vmem>>, vector<128x128xbf16>
    %cst = arith.constant dense<0.000000e+00> : vector<16x128xf32>
    %5 = tpu.matmul %3, %4, %cst {dimension_numbers = #tpu.dot_dimension_numbers<[1], [0], [0], [1], [0, 0, 1, 1], [], []>} : vector<16x128xbf16>, vector<128x128xbf16>, vector<16x128xf32> -> vector<16x128xf32>
    %c0_4 = arith.constant 0 : index
    %c0_5 = arith.constant 0 : index
    %6 = vector.load %arg6[%c0_4, %c0_5] : memref<1x128xf32, #tpu.memory_space<vmem>>, vector<1x128xf32>
    %7 = vector.broadcast %6 : vector<1x128xf32> to vector<16x128xf32>
    %8 = arith.addf %5, %7 : vector<16x128xf32>
    %cst_6 = arith.constant 0.000000e+00 : f32
    %9 = vector.broadcast %cst_6 : f32 to vector<16x128xf32>
    %10 = arith.maximumf %8, %9 : vector<16x128xf32>
    %c0_7 = arith.constant 0 : index
    %c0_8 = arith.constant 0 : index
    %11 = vector.load %arg11[%c0_7, %c0_8] : memref<16x128xf32, #tpu.memory_space<vmem>>, vector<16x128xf32>
    %12 = arith.truncf %10 : vector<16x128xf32> to vector<16x128xbf16>
    %c0_9 = arith.constant 0 : index
    %c0_10 = arith.constant 0 : index
    %13 = vector.load %arg7[%c0_9, %c0_10] : memref<128x128xbf16, #tpu.memory_space<vmem>>, vector<128x128xbf16>
    %cst_11 = arith.constant dense<0.000000e+00> : vector<16x128xf32>
    %14 = tpu.matmul %12, %13, %cst_11 {dimension_numbers = #tpu.dot_dimension_numbers<[1], [0], [0], [1], [0, 0, 1, 1], [], []>} : vector<16x128xbf16>, vector<128x128xbf16>, vector<16x128xf32> -> vector<16x128xf32>
    %15 = arith.addf %11, %14 : vector<16x128xf32>
    %c0_12 = arith.constant 0 : index
    %c0_13 = arith.constant 0 : index
    %16 = vector.load %arg11[%c0_12, %c0_13] : memref<16x128xf32, #tpu.memory_space<vmem>>, vector<16x128xf32>
    tpu.vector_store %arg11[%c0_12, %c0_13], %15 {strides = array<i32>} : memref<16x128xf32, #tpu.memory_space<vmem>>, vector<16x128xf32>,
    %c0_i32_14 = arith.constant 0 : i32
    %17 = arith.cmpi eq, %arg1, %c0_i32_14 : i32
    %18 = arith.extui %17 : i1 to i32
    %c0_i32_15 = arith.constant 0 : i32
    %19 = arith.cmpi ne, %18, %c0_i32_15 : i32
    scf.if %19 {
      %c0_16 = arith.constant 0 : index
      %c0_17 = arith.constant 0 : index
      %20 = vector.load %arg11[%c0_16, %c0_17] : memref<16x128xf32, #tpu.memory_space<vmem>>, vector<16x128xf32>
      %c0_18 = arith.constant 0 : index
      %c0_19 = arith.constant 0 : index
      %21 = vector.load %arg8[%c0_18, %c0_19] : memref<1x128xf32, #tpu.memory_space<vmem>>, vector<1x128xf32>
      %22 = vector.broadcast %21 : vector<1x128xf32> to vector<16x128xf32>
      %23 = arith.addf %20, %22 : vector<16x128xf32>
      %c0_20 = arith.constant 0 : index
      %c0_21 = arith.constant 0 : index
      %24 = vector.load %arg9[%c0_20, %c0_21] : memref<16x128xf32, #tpu.memory_space<vmem>>, vector<16x128xf32>
      tpu.vector_store %arg9[%c0_20, %c0_21], %23 {strides = array<i32>} : memref<16x128xf32, #tpu.memory_space<vmem>>, vector<16x128xf32>,
    } else {
    }
    return
  }
  func.func @transform_0(%arg0: i32, %arg1: i32) -> (i32, i32) {
    %c0_i32 = arith.constant 0 : i32
    %c0_i32_0 = arith.constant 0 : i32
    return %arg0, %c0_i32 : i32, i32
  }
  func.func @transform_1(%arg0: i32, %arg1: i32) -> (i32, i32) {
    %c0_i32 = arith.constant 0 : i32
    %c0_i32_0 = arith.constant 0 : i32
    %c0_i32_1 = arith.constant 0 : i32
    return %c0_i32, %c0_i32_0 : i32, i32
  }
  func.func @transform_2(%arg0: i32, %arg1: i32) -> (i32, i32) {
    %c0_i32 = arith.constant 0 : i32
    %c0_i32_0 = arith.constant 0 : i32
    %c0_i32_1 = arith.constant 0 : i32
    return %c0_i32, %c0_i32_0 : i32, i32
  }
  func.func @transform_3(%arg0: i32, %arg1: i32) -> (i32, i32) {
    %c0_i32 = arith.constant 0 : i32
    %c0_i32_0 = arith.constant 0 : i32
    return %c0_i32, %arg1 : i32, i32
  }
  func.func @transform_4(%arg0: i32, %arg1: i32) -> (i32, i32) {
    %c0_i32 = arith.constant 0 : i32
    %c0_i32_0 = arith.constant 0 : i32
    return %c0_i32, %arg1 : i32, i32
  }
  func.func @transform_5(%arg0: i32, %arg1: i32) -> (i32, i32) {
    %c0_i32 = arith.constant 0 : i32
    %c0_i32_0 = arith.constant 0 : i32
    return %arg1, %c0_i32 : i32, i32
  }
  func.func @transform_6(%arg0: i32, %arg1: i32) -> (i32, i32) {
    %c0_i32 = arith.constant 0 : i32
    %c0_i32_0 = arith.constant 0 : i32
    %c0_i32_1 = arith.constant 0 : i32
    return %c0_i32, %c0_i32_0 : i32, i32
  }
  func.func @transform_7(%arg0: i32, %arg1: i32) -> (i32, i32) {
    %c0_i32 = arith.constant 0 : i32
    %c0_i32_0 = arith.constant 0 : i32
    return %arg0, %c0_i32 : i32, i32
  }
}

</mosaic_0001>

<llo_original>
// kernel: transformer_linear.1
$region0: #{transformer_linear.1}
  #allocation0 [shape = 'u32[]', space=smem, size = 0x4, offset = 0x4, fixed_abs, tag = 'smem constant byte address 0x4 - core index']
  #allocation1 [shape = 'u32[144,128]{1,0:T(1,128)}', space=vmem, size = 0x12000, scoped, tag = 'internal scratch']
  #allocation2 [shape = 'bf16[16,128]{1,0:T(16,128)(2,1)}', space=vmem, size = 0x1000, scoped, tag = 'scratch operand']
  #allocation3 [shape = 'f32[16,128]{1,0:T(8,128)}', space=vmem, size = 0x2000, scoped, tag = 'scratch operand']
  %s0 = inlined_call_operand.vmem [shape: f32[16,128], index: 0, kind: input, shape index: {}]
  %s1 = inlined_call_operand.vmem [shape: f32[1,128], index: 1, kind: input, shape index: {}]
  %s2 = inlined_call_operand.vmem [shape: f32[1,128], index: 2, kind: input, shape index: {}]
  %s3 = inlined_call_operand.vmem [shape: bf16[128,128], index: 3, kind: input, shape index: {}]
  %s4 = inlined_call_operand.vmem [shape: f32[1,128], index: 4, kind: input, shape index: {}]
  %s5 = inlined_call_operand.vmem [shape: bf16[128,128], index: 5, kind: input, shape index: {}]
  %s6 = inlined_call_operand.vmem [shape: f32[1,128], index: 6, kind: input, shape index: {}]
  %s7 = inlined_call_operand.vmem [shape: f32[16,128], index: 7, kind: output, shape index: {}]
  %s8 = sld [smem:[#allocation0]]
  $region46: #{transformer_linear.1} parent=0
    _
  %s10 = ssub.s32 1, %s8
  %s11 = scalar_select 0, %s10, %s8
  // Predicated region
  $region2: #{transformer_linear.1} parent=0 // pred_check
    _
  $region3: #{transformer_linear.1} parent=0 // pred_check_branch
    %13 = sbr.rel (0) target = $region5
  $region4: #{transformer_linear.1} parent=0 // pred_region
    _
  $region5: #{transformer_linear.1} parent=0 // pred_fallthru
    _
  // Predicated region
  $region6: #{transformer_linear.1} parent=0 // pred_check
    _
  $region7: #{transformer_linear.1} parent=0 // pred_check_branch
    %15 = sbr.rel (0) target = $region9
  $region8: #{transformer_linear.1} parent=0 // pred_region
    _
  $region9: #{transformer_linear.1} parent=0 // pred_fallthru
    _
  // Predicated region
  $region10: #{transformer_linear.1} parent=0 // pred_check
    _
  $region11: #{transformer_linear.1} parent=0 // pred_check_branch
    %17 = sbr.rel (0) target = $region13
  $region12: #{transformer_linear.1} parent=0 // pred_region
    _
  $region13: #{transformer_linear.1} parent=0 // pred_fallthru
    _
  // Predicated region
  $region14: #{transformer_linear.1} parent=0 // pred_check
    _
  $region15: #{transformer_linear.1} parent=0 // pred_check_branch
    %19 = sbr.rel (0) target = $region17
  $region16: #{transformer_linear.1} parent=0 // pred_region
    _
  $region17: #{transformer_linear.1} parent=0 // pred_fallthru
    _
  // Predicated region
  $region18: #{transformer_linear.1} parent=0 // pred_check
    _
  $region19: #{transformer_linear.1} parent=0 // pred_check_branch
    %21 = sbr.rel (0) target = $region21
  $region20: #{transformer_linear.1} parent=0 // pred_region
    _
  $region21: #{transformer_linear.1} parent=0 // pred_fallthru
    _
  // Predicated region
  $region22: #{transformer_linear.1} parent=0 // pred_check
    _
  $region23: #{transformer_linear.1} parent=0 // pred_check_branch
    %23 = sbr.rel (0) target = $region25
  $region24: #{transformer_linear.1} parent=0 // pred_region
    _
  $region25: #{transformer_linear.1} parent=0 // pred_fallthru
    _
  // Predicated region
  $region26: #{transformer_linear.1} parent=0 // pred_check
    _
  $region27: #{transformer_linear.1} parent=0 // pred_check_branch
    %25 = sbr.rel (0) target = $region29
  $region28: #{transformer_linear.1} parent=0 // pred_region
    _
  $region29: #{transformer_linear.1} parent=0 // pred_fallthru
    _
  %p27 = scmp.eq.s32.totalorder 0, 0
  // Predicated region
  $region30: #{transformer_linear.1} parent=0 // pred_check
    %p28 = pneg %p27
  $region31: #{transformer_linear.1} parent=0 // pred_check_branch
    %30 = sbr.rel (%p28) target = $region33
  $region32: #{transformer_linear.1} parent=0 // pred_region
    %v31 = vld [vmem:[%s0] sm:$0xff]
    %v32 = vld [vmem:[%s0 + $0x8] sm:$0xff]
    %33 = vadd.xlane.f32.xlu0 %v31
    %v34 = vpop.xlane.xlu0 %33
    %35 = vadd.xlane.f32.xlu0 %v32
    %v36 = vpop.xlane.xlu0 %35
    %v37 = vmul.f32 %v34, 0.03125
    %v38 = vmul.f32 %v36, 0.03125
    %v39 = vsub.f32 %v31, %v37
    %v40 = vsub.f32 %v32, %v38
    %v41 = vlaneseq
    %v42 = vand.u32 %v41, 127
    %vm43 = vcmp.lt.s32.totalorder %v42, 32
    %v44 = vsel %vm43, %v39, 0.0
    %v45 = vsel %vm43, %v40, 0.0
    %v46 = vmul.f32 %v44, %v44
    %v47 = vmul.f32 %v45, %v45
    %48 = vadd.xlane.f32.xlu0 %v46
    %v49 = vpop.xlane.xlu0 %48
    %50 = vadd.xlane.f32.xlu0 %v47
    %v51 = vpop.xlane.xlu0 %50
    %v52 = vmul.f32 %v49, 0.03125
    %v53 = vmul.f32 %v51, 0.03125
    %v54 = vadd.f32 %v52, 1e-05
    %v55 = vadd.f32 %v53, 1e-05
    %v56 = vrsqrt.pop %v54
    %v57 = vrsqrt.pop %v55
    %v58 = vmul.f32 %v44, %v56
    %v59 = vmul.f32 %v45, %v57
    %v60 = vld [vmem:[%s1] sm:$0x1]
    %v62 = vlaneseq
    %v63 = vshrl.u32 %v62, 7
    %v64 = vsub.s32 0, %v63
    %v65 = vrot.slane %v60, %v64
    %v67 = vmul.f32 %v58, %v65
    %v68 = vmul.f32 %v59, %v65
    %v69 = vld [vmem:[%s2] sm:$0x1]
    %v71 = vlaneseq
    %v72 = vshrl.u32 %v71, 7
    %v73 = vsub.s32 0, %v72
    %v74 = vrot.slane %v69, %v73
    %v76 = vadd.f32 %v67, %v74
    %v77 = vadd.f32 %v68, %v74
    %v78 = vpack.c.bf16 %v77, %v76
    %79 = vst [vmem:[#allocation2] sm:$0xff] %v78
    %80 = vst [vmem:[#allocation3] sm:$0xff] 0.0
    %81 = vst [vmem:[#allocation3 + $0x8] sm:$0xff] 0.0
  $region33: #{transformer_linear.1} parent=0 // pred_fallthru
    _
  %v82 = vld [vmem:[#allocation2] sm:$0xff]
  %v83 = vld [vmem:[%s3] sm:$0xf]
  %v84 = vld [vmem:[%s3 + $0x4] sm:$0xf]
  %v85 = vld [vmem:[%s3 + $0x8] sm:$0xf]
  %v86 = vld [vmem:[%s3 + $0xc] sm:$0xf]
  %v87 = vld [vmem:[%s3 + $0x10] sm:$0xf]
  %v88 = vld [vmem:[%s3 + $0x14] sm:$0xf]
  %v89 = vld [vmem:[%s3 + $0x18] sm:$0xf]
  %v90 = vld [vmem:[%s3 + $0x1c] sm:$0xf]
  %v91 = vld [vmem:[%s3 + $0x20] sm:$0xf]
  %v92 = vld [vmem:[%s3 + $0x24] sm:$0xf]
  %v93 = vld [vmem:[%s3 + $0x28] sm:$0xf]
  %v94 = vld [vmem:[%s3 + $0x2c] sm:$0xf]
  %v95 = vld [vmem:[%s3 + $0x30] sm:$0xf]
  %v96 = vld [vmem:[%s3 + $0x34] sm:$0xf]
  %v97 = vld [vmem:[%s3 + $0x38] sm:$0xf]
  %v98 = vld [vmem:[%s3 + $0x3c] sm:$0xf]
  %v99 = vld [vmem:[%s4] sm:$0x1]
  %v101 = vlaneseq
  %v102 = vshrl.u32 %v101, 7
  %v103 = vsub.s32 0, %v102
  %v104 = vrot.slane %v99, %v103
  %v122 = vunpack.c.l.b16 %v83
  %v123 = vunpack.c.l.b16 %v84
  %v124 = vunpack.c.l.b16 %v85
  %v125 = vunpack.c.l.b16 %v86
  %v126 = vunpack.c.l.b16 %v87
  %v127 = vunpack.c.l.b16 %v88
  %v128 = vunpack.c.l.b16 %v89
  %v129 = vunpack.c.l.b16 %v90
  %v130 = vunpack.c.l.b16 %v91
  %v131 = vunpack.c.l.b16 %v92
  %v132 = vunpack.c.l.b16 %v93
  %v133 = vunpack.c.l.b16 %v94
  %v134 = vunpack.c.l.b16 %v95
  %v135 = vunpack.c.l.b16 %v96
  %v136 = vunpack.c.l.b16 %v97
  %v137 = vunpack.c.l.b16 %v98
  %v138 = vpack.c.b16 %v123, %v122
  %v139 = vpack.c.b16 %v125, %v124
  %v140 = vpack.c.b16 %v127, %v126
  %v141 = vpack.c.b16 %v129, %v128
  %v142 = vpack.c.b16 %v131, %v130
  %v143 = vpack.c.b16 %v133, %v132
  %v144 = vpack.c.b16 %v135, %v134
  %v145 = vpack.c.b16 %v137, %v136
  %154 = vmatprep.subr.bf16.mxu0 0
  %155 = vmatpush1.bf16.msra.mxu0 %v138
  %156 = vmatprep.subr.bf16.mxu0 0
  %157 = vmatpush1.bf16.msra.mxu0 %v139
  %158 = vmatprep.subr.bf16.mxu0 0
  %159 = vmatpush1.bf16.msra.mxu0 %v140
  %160 = vmatprep.subr.bf16.mxu0 0
  %161 = vmatpush1.bf16.msra.mxu0 %v141
  %162 = vmatprep.subr.bf16.mxu0 0
  %163 = vmatpush1.bf16.msra.mxu0 %v142
  %164 = vmatprep.subr.bf16.mxu0 0
  %165 = vmatpush1.bf16.msra.mxu0 %v143
  %166 = vmatprep.subr.bf16.mxu0 0
  %167 = vmatpush1.bf16.msra.mxu0 %v144
  %168 = vmatprep.subr.bf16.mxu0 0
  %169 = vmatpush1.bf16.msra.mxu0 %v145
  %170 = vmatprep.subr.bf16.mxu0 0
  %171 = vmatpush1.bf16.msra.mxu0 0
  %172 = vmatprep.subr.bf16.mxu0 0
  %173 = vmatpush1.bf16.msra.mxu0 0
  %174 = vmatprep.subr.bf16.mxu0 0
  %175 = vmatpush1.bf16.msra.mxu0 0
  %176 = vmatprep.subr.bf16.mxu0 0
  %177 = vmatpush1.bf16.msra.mxu0 0
  %178 = vmatprep.subr.bf16.mxu0 0
  %179 = vmatpush1.bf16.msra.mxu0 0
  %180 = vmatprep.subr.bf16.mxu0 0
  %181 = vmatpush1.bf16.msra.mxu0 0
  %182 = vmatprep.subr.bf16.mxu0 0
  %183 = vmatpush1.bf16.msra.mxu0 0
  %184 = vmatprep.subr.bf16.mxu0 0
  %185 = vmatpush1.bf16.msra.mxu0 0
  %186 = vmatprep.mubr.bf16.mxu0 0
  %187 = vmatmul.mubr.bf16.gmra.mrb[0].mxu0 %v82
  %v188 = vpop.f32.mrb[0].mxu0
  %v189 = vadd.f32 %v104, %v188
  %v190 = vpop.f32.mrb[0].mxu0
  %v191 = vpop.f32.mrb[0].mxu0
  %v192 = vadd.f32 %v104, %v191
  %v193 = vpop.f32.mrb[0].mxu0
  %194 = vdwg.mxu0
  %v195 = vmax.f32 %v189, 0.0
  %v196 = vmax.f32 %v192, 0.0
  %v197 = vld [vmem:[#allocation3] sm:$0xff]
  %v198 = vld [vmem:[#allocation3 + $0x8] sm:$0xff]
  %v199 = vpack.c.bf16 %v196, %v195
  %v200 = vld [vmem:[%s5] sm:$0xf]
  %v201 = vld [vmem:[%s5 + $0x4] sm:$0xf]
  %v202 = vld [vmem:[%s5 + $0x8] sm:$0xf]
  %v203 = vld [vmem:[%s5 + $0xc] sm:$0xf]
  %v204 = vld [vmem:[%s5 + $0x10] sm:$0xf]
  %v205 = vld [vmem:[%s5 + $0x14] sm:$0xf]
  %v206 = vld [vmem:[%s5 + $0x18] sm:$0xf]
  %v207 = vld [vmem:[%s5 + $0x1c] sm:$0xf]
  %v208 = vld [vmem:[%s5 + $0x20] sm:$0xf]
  %v209 = vld [vmem:[%s5 + $0x24] sm:$0xf]
  %v210 = vld [vmem:[%s5 + $0x28] sm:$0xf]
  %v211 = vld [vmem:[%s5 + $0x2c] sm:$0xf]
  %v212 = vld [vmem:[%s5 + $0x30] sm:$0xf]
  %v213 = vld [vmem:[%s5 + $0x34] sm:$0xf]
  %v214 = vld [vmem:[%s5 + $0x38] sm:$0xf]
  %v215 = vld [vmem:[%s5 + $0x3c] sm:$0xf]
  %v232 = vunpack.c.l.b16 %v200
  %v233 = vunpack.c.l.b16 %v201
  %v234 = vunpack.c.l.b16 %v202
  %v235 = vunpack.c.l.b16 %v203
  %v236 = vunpack.c.l.b16 %v204
  %v237 = vunpack.c.l.b16 %v205
  %v238 = vunpack.c.l.b16 %v206
  %v239 = vunpack.c.l.b16 %v207
  %v240 = vunpack.c.l.b16 %v208
  %v241 = vunpack.c.l.b16 %v209
  %v242 = vunpack.c.l.b16 %v210
  %v243 = vunpack.c.l.b16 %v211
  %v244 = vunpack.c.l.b16 %v212
  %v245 = vunpack.c.l.b16 %v213
  %v246 = vunpack.c.l.b16 %v214
  %v247 = vunpack.c.l.b16 %v215
  %v248 = vpack.c.b16 %v233, %v232
  %v249 = vpack.c.b16 %v235, %v234
  %v250 = vpack.c.b16 %v237, %v236
  %v251 = vpack.c.b16 %v239, %v238
  %v252 = vpack.c.b16 %v241, %v240
  %v253 = vpack.c.b16 %v243, %v242
  %v254 = vpack.c.b16 %v245, %v244
  %v255 = vpack.c.b16 %v247, %v246
  %264 = vmatprep.subr.bf16.mxu0 0
  %265 = vmatpush1.bf16.msra.mxu0 %v248
  %266 = vmatprep.subr.bf16.mxu0 0
  %267 = vmatpush1.bf16.msra.mxu0 %v249
  %268 = vmatprep.subr.bf16.mxu0 0
  %269 = vmatpush1.bf16.msra.mxu0 %v250
  %270 = vmatprep.subr.bf16.mxu0 0
  %271 = vmatpush1.bf16.msra.mxu0 %v251
  %272 = vmatprep.subr.bf16.mxu0 0
  %273 = vmatpush1.bf16.msra.mxu0 %v252
  %274 = vmatprep.subr.bf16.mxu0 0
  %275 = vmatpush1.bf16.msra.mxu0 %v253
  %276 = vmatprep.subr.bf16.mxu0 0
  %277 = vmatpush1.bf16.msra.mxu0 %v254
  %278 = vmatprep.subr.bf16.mxu0 0
  %279 = vmatpush1.bf16.msra.mxu0 %v255
  %280 = vmatprep.subr.bf16.mxu0 0
  %281 = vmatpush1.bf16.msra.mxu0 0
  %282 = vmatprep.subr.bf16.mxu0 0
  %283 = vmatpush1.bf16.msra.mxu0 0
  %284 = vmatprep.subr.bf16.mxu0 0
  %285 = vmatpush1.bf16.msra.mxu0 0
  %286 = vmatprep.subr.bf16.mxu0 0
  %287 = vmatpush1.bf16.msra.mxu0 0
  %288 = vmatprep.subr.bf16.mxu0 0
  %289 = vmatpush1.bf16.msra.mxu0 0
  %290 = vmatprep.subr.bf16.mxu0 0
  %291 = vmatpush1.bf16.msra.mxu0 0
  %292 = vmatprep.subr.bf16.mxu0 0
  %293 = vmatpush1.bf16.msra.mxu0 0
  %294 = vmatprep.subr.bf16.mxu0 0
  %295 = vmatpush1.bf16.msra.mxu0 0
  %296 = vmatprep.mubr.bf16.mxu0 0
  %297 = vmatmul.mubr.bf16.gmra.mrb[0].mxu0 %v199
  %v298 = vpop.f32.mrb[0].mxu0
  %v299 = vadd.f32 0.0, %v298
  %v300 = vpop.f32.mrb[0].mxu0
  %v301 = vpop.f32.mrb[0].mxu0
  %v302 = vadd.f32 0.0, %v301
  %v303 = vpop.f32.mrb[0].mxu0
  %304 = vdwg.mxu0
  %v305 = vadd.f32 %v197, %v299
  %v306 = vadd.f32 %v198, %v302
  %307 = vst [vmem:[#allocation3] sm:$0xff] %v305
  %308 = vst [vmem:[#allocation3 + $0x8] sm:$0xff] %v306
  // Predicated region
  $region34: #{transformer_linear.1} parent=0 // pred_check
    %p309 = pneg %p27
  $region35: #{transformer_linear.1} parent=0 // pred_check_branch
    %311 = sbr.rel (%p309) target = $region37
  $region36: #{transformer_linear.1} parent=0 // pred_region
    %v312 = vld [vmem:[#allocation3] sm:$0xff]
    %v313 = vld [vmem:[#allocation3 + $0x8] sm:$0xff]
    %v314 = vld [vmem:[%s6] sm:$0x1]
    %v316 = vlaneseq
    %v317 = vshrl.u32 %v316, 7
    %v318 = vsub.s32 0, %v317
    %v319 = vrot.slane %v314, %v318
    %v321 = vadd.f32 %v312, %v319
    %v322 = vadd.f32 %v313, %v319
    %323 = vst [vmem:[%s7] sm:$0xff] %v321
    %324 = vst [vmem:[%s7 + $0x8] sm:$0xff] %v322
  $region37: #{transformer_linear.1} parent=0 // pred_fallthru
    _
  // Predicated region
  $region38: #{transformer_linear.1} parent=0 // pred_check
    _
  $region39: #{transformer_linear.1} parent=0 // pred_check_branch
    %326 = sbr.rel (0) target = $region41
  $region40: #{transformer_linear.1} parent=0 // pred_region
    _
  $region41: #{transformer_linear.1} parent=0 // pred_fallthru
    _
  // Predicated region
  $region42: #{transformer_linear.1} parent=0 // pred_check
    _
  $region43: #{transformer_linear.1} parent=0 // pred_check_branch
    %328 = sbr.rel (0) target = $region45
  $region44: #{transformer_linear.1} parent=0 // pred_region
    _
  $region45: #{transformer_linear.1} parent=0 // pred_fallthru
    _

</llo_original>
